<compile_context>
chip_gen: v7x
topology: tpu7x:2x2x1
jax: 0.10.0
libtpu: 0.0.40
codegen_flags: <defaults>
</compile_context>

<pallas_src>
import jax
import jax.numpy as jnp
from jax.experimental import pallas as pl
from jax.experimental.pallas import tpu as pltpu


def _round_up(x, m):
    return ((x + m - 1) // m) * m


def _residual_linear_kernel(x_ref, w_ref, b_ref, o_ref):
    """o = (x @ W + b) + x   -- fn(x) + x fused in one pass over x."""
    x = x_ref[...]                                     # (tm, D), original dtype (f32)
    xm = x.astype(w_ref.dtype)                         # bf16 operands feed the MXU at full rate
    y = jnp.dot(xm, w_ref[...], preferred_element_type=jnp.float32)   # MXU, f32 accumulate
    y = y + b_ref[...].astype(jnp.float32)             # broadcast (1, D)
    o_ref[...] = (y + x.astype(jnp.float32)).astype(o_ref.dtype)      # residual add in f32


# Keep per-step tile footprint comfortably under every generation's usable VMEM
# (v7x: 64 MiB physical per TC; v5e: 16 MiB default scoped unless raised).
_VMEM_TILE_BUDGET = 28 * 1024 * 1024


def _pick_row_tile(M, D, x_bytes, o_bytes, w_bytes):
    """Largest 128-multiple row tile whose double-buffered footprint fits the budget."""
    for tm in (1024, 512, 256, 128):
        if tm > M:
            continue
        footprint = 2 * tm * D * (x_bytes + o_bytes) + 2 * D * D * w_bytes
        if footprint <= _VMEM_TILE_BUDGET:
            return tm
    # tiny M: a single block covering all (sublane-rounded) rows
    return _round_up(min(M, 128), 8)


def residual_linear(x2d, w, b, *, tm=None, use_bf16_matmul=True, donate_x=False):
    """x2d: (M, D), w: (D, D), b: (D,) or (1, D).  Returns fn(x) + x = x @ W + b + x."""
    M, D = x2d.shape
    assert w.shape == (D, D), "fn is Linear(D, D)"
    out_dtype = x2d.dtype

    # bf16 weight halves its DMA bytes and runs the MXU at full rate on v6e/v7x;
    # x stays in its original dtype so the residual add is exact.
    w_c = w.astype(jnp.bfloat16) if use_bf16_matmul else w.astype(out_dtype)
    b2d = jnp.reshape(b, (1, D)).astype(jnp.float32)

    if tm is None:
        tm = _pick_row_tile(M, D,
                            x2d.dtype.itemsize,
                            jnp.dtype(out_dtype).itemsize,
                            w_c.dtype.itemsize)
    tm = max(8, _round_up(int(tm), 8))

    # Tail handling: pad rows up to a multiple of the tile; padded rows are discarded below.
    M_pad = _round_up(M, tm)
    x_in = jnp.pad(x2d, ((0, M_pad - M), (0, 0))) if M_pad != M else x2d
    grid = (M_pad // tm,)

    # Explicit VMEM sizing: double-buffered x & out tiles + (double-buffered) resident weight + bias.
    footprint = (2 * tm * D * (x_in.dtype.itemsize + jnp.dtype(out_dtype).itemsize)
                 + 2 * D * D * w_c.dtype.itemsize
                 + 2 * _round_up(D, 128) * 4)
    vmem_limit = int(min(64 << 20, max(2 * footprint, 16 << 20)))

    call = pl.pallas_call(
        _residual_linear_kernel,
        out_shape=jax.ShapeDtypeStruct((M_pad, D), out_dtype),
        grid_spec=pltpu.PrefetchScalarGridSpec(
            num_scalar_prefetch=0,
            grid=grid,
            in_specs=[
                pl.BlockSpec((tm, D), lambda i: (i, 0)),   # x row-tile (streamed)
                pl.BlockSpec((D, D), lambda i: (0, 0)),    # full weight, resident
                pl.BlockSpec((1, D), lambda i: (0, 0)),    # bias, resident
            ],
            out_specs=pl.BlockSpec((tm, D), lambda i: (i, 0)),
        ),
        compiler_params=pltpu.CompilerParams(
            dimension_semantics=("parallel",),             # rows shard across TCs (v7x megacore)
            vmem_limit_bytes=vmem_limit,
        ),
        input_output_aliases=({0: 0} if donate_x else {}),
    )
    out = call(x_in, w_c, b2d)
    return out[:M] if M_pad != M else out


class Residual:
    """JAX port of the PyTorch Residual wrapper: forward(x) = fn(x) + x."""

    def __init__(self, fn):
        self.fn = fn

    def __call__(self, x, **kwargs):
        return self.fn(x, **kwargs) + x


class PallasLinearResidual:
    """Fused variant: fn = Linear(D, D); fn(x) + x computed inside one Pallas kernel."""

    def __init__(self, w, b, *, use_bf16_matmul=True):
        self.w = w                     # (D, D)
        self.b = b                     # (D,)
        self.use_bf16_matmul = use_bf16_matmul

    def __call__(self, x):
        # x: (B, N, D) -> flatten tokens -> kernel -> restore shape
        B, N, D = x.shape
        x2d = x.reshape(B * N, D)
        out2d = residual_linear(x2d, self.w, self.b,
                                use_bf16_matmul=self.use_bf16_matmul)
        return out2d.reshape(B, N, D)


if __name__ == "__main__":
    key = jax.random.PRNGKey(0)
    k_x, k_w, k_b, k_x2 = jax.random.split(key, 4)

    # Small, lane-dense shapes: batch=2, seq=8, hidden=128 (D >= 128 keeps stores unmasked).
    B, N, D = 2, 8, 128
    x = jax.random.normal(k_x, (B, N, D), dtype=jnp.float32)
    w = jax.random.normal(k_w, (D, D), dtype=jnp.float32) * 0.02
    b = jax.random.normal(k_b, (D,), dtype=jnp.float32) * 0.02

    # Plain-JAX reference of the Residual semantics: fn(x) + x
    ref_fn = lambda t: jnp.einsum("bnd,de->bne", t, w) + b
    ref = Residual(ref_fn)(x)

    # 1) exact f32 matmul path
    block_f32 = PallasLinearResidual(w, b, use_bf16_matmul=False)
    out_f32 = jax.block_until_ready(block_f32(x))
    assert out_f32.shape == x.shape and out_f32.dtype == x.dtype
    assert jnp.allclose(out_f32, ref, atol=1e-5, rtol=1e-5)

    # 2) bf16-operand MXU fast path (v6e/v7x); residual still added in f32
    block_bf16 = PallasLinearResidual(w, b, use_bf16_matmul=True)
    out_bf16 = jax.block_until_ready(block_bf16(x))
    assert jnp.allclose(out_bf16, ref, atol=3e-2, rtol=3e-2)

    # 3) token count not a multiple of the row tile -> exercises the padding tail path
    B2, N2 = 2, 11                                   # M = 22 rows
    x2 = jax.random.normal(k_x2, (B2, N2, D), dtype=jnp.float32)
    ref2 = Residual(ref_fn)(x2)
    out2 = jax.block_until_ready(block_f32(x2))
    assert jnp.allclose(out2, ref2, atol=1e-5, rtol=1e-5)

    print("KERNEL_OK")
</pallas_src>

<mosaic_0001>
module attributes {stable_mosaic.version = 11 : i64} {
  func.func @_residual_linear_kernel(%arg0: i32, %arg1: memref<16x128xf32, #tpu.memory_space<vmem>>, %arg2: memref<128x128xf32, #tpu.memory_space<vmem>>, %arg3: memref<1x128xf32, #tpu.memory_space<vmem>>, %arg4: memref<16x128xf32, #tpu.memory_space<vmem>>) attributes {dimension_semantics = [#tpu.dimension_semantics<parallel>], iteration_bounds = array<i64: 1>, scalar_prefetch = 0 : i64, scratch_operands = 0 : i64, tpu.core_type = #tpu.core_type<tc>, window_params = [{transform_indices = @transform_0, window_bounds = array<i64: 16, 128>}, {pipeline_mode = #tpu.pipeline_mode<synchronous>, transform_indices = @transform_1, window_bounds = array<i64: 128, 128>}, {pipeline_mode = #tpu.pipeline_mode<synchronous>, transform_indices = @transform_2, window_bounds = array<i64: 1, 128>}, {transform_indices = @transform_3, window_bounds = array<i64: 16, 128>}]} {
    %c0 = arith.constant 0 : index
    %c0_0 = arith.constant 0 : index
    %0 = vector.load %arg1[%c0, %c0_0] : memref<16x128xf32, #tpu.memory_space<vmem>>, vector<16x128xf32>
    %c0_1 = arith.constant 0 : index
    %c0_2 = arith.constant 0 : index
    %1 = vector.load %arg2[%c0_1, %c0_2] : memref<128x128xf32, #tpu.memory_space<vmem>>, vector<128x128xf32>
    %cst = arith.constant dense<0.000000e+00> : vector<16x128xf32>
    %2 = tpu.matmul %0, %1, %cst {dimension_numbers = #tpu.dot_dimension_numbers<[1], [0], [0], [1], [0, 0, 1, 1], [], []>} : vector<16x128xf32>, vector<128x128xf32>, vector<16x128xf32> -> vector<16x128xf32>
    %c0_3 = arith.constant 0 : index
    %c0_4 = arith.constant 0 : index
    %3 = vector.load %arg3[%c0_3, %c0_4] : memref<1x128xf32, #tpu.memory_space<vmem>>, vector<1x128xf32>
    %4 = vector.broadcast %3 : vector<1x128xf32> to vector<16x128xf32>
    %5 = arith.addf %2, %4 : vector<16x128xf32>
    %6 = arith.addf %5, %0 : vector<16x128xf32>
    %c0_5 = arith.constant 0 : index
    %c0_6 = arith.constant 0 : index
    %7 = vector.load %arg4[%c0_5, %c0_6] : memref<16x128xf32, #tpu.memory_space<vmem>>, vector<16x128xf32>
    tpu.vector_store %arg4[%c0_5, %c0_6], %6 {strides = array<i32>} : memref<16x128xf32, #tpu.memory_space<vmem>>, vector<16x128xf32>,
    return
  }
  func.func @transform_0(%arg0: i32) -> (i32, i32) {
    %c0_i32 = arith.constant 0 : i32
    %c0_i32_0 = arith.constant 0 : i32
    return %arg0, %c0_i32 : i32, i32
  }
  func.func @transform_1(%arg0: i32) -> (i32, i32) {
    %c0_i32 = arith.constant 0 : i32
    %c0_i32_0 = arith.constant 0 : i32
    %c0_i32_1 = arith.constant 0 : i32
    return %c0_i32, %c0_i32_0 : i32, i32
  }
  func.func @transform_2(%arg0: i32) -> (i32, i32) {
    %c0_i32 = arith.constant 0 : i32
    %c0_i32_0 = arith.constant 0 : i32
    %c0_i32_1 = arith.constant 0 : i32
    return %c0_i32, %c0_i32_0 : i32, i32
  }
  func.func @transform_3(%arg0: i32) -> (i32, i32) {
    %c0_i32 = arith.constant 0 : i32
    %c0_i32_0 = arith.constant 0 : i32
    return %arg0, %c0_i32 : i32, i32
  }
}

</mosaic_0001>

<llo_original>
// kernel: tpu_custom_call.1
$region0: #{tpu_custom_call.1}
  #allocation0 [shape = 'u32[]', space=smem, size = 0x4, offset = 0x4, fixed_abs, tag = 'smem constant byte address 0x4 - core index']
  #allocation1 [shape = 'u32[144,128]{1,0:T(1,128)}', space=vmem, size = 0x12000, scoped, tag = 'internal scratch']
  %s0 = inlined_call_operand.hbm [shape: f32[16,128], index: 0, kind: input, shape index: {}]
  %s1 = inlined_call_operand.hbm [shape: f32[128,128], index: 1, kind: input, shape index: {}]
  %s2 = inlined_call_operand.vmem [shape: f32[1,128], index: 2, kind: input, shape index: {}]
  %s3 = inlined_call_operand.hbm [shape: f32[16,128], index: 3, kind: output, shape index: {}]
  %s4 = sld [smem:[#allocation0]]
  $region30: #{tpu_custom_call.1} parent=0
    _
  %s6 = ssub.s32 1, %s4
  %s7 = scalar_select 0, %s6, %s4
  $region1: #{tpu_custom_call.1} parent=0
    #allocation2 [shape = 'u8[8192]{0}', space=vmem, size = 0x2000, scoped, tag = 'input window, operand 0, single buffered']
    #allocation3 [shape = 's32[1]{0}', space=sflag, size = 0x4, scoped, tag = 'scoped memory for tpu_custom_call.1']
    #allocation4 [shape = 's32[1]{0}', space=sflag, size = 0x4, scoped, tag = 'scoped memory for tpu_custom_call.1']
    #allocation5 [shape = 'u8[65536]{0}', space=vmem, size = 0x10000, scoped, tag = 'input window, operand 1, single buffered']
    #allocation6 [shape = 's32[1]{0}', space=sflag, size = 0x4, scoped, tag = 'scoped memory for tpu_custom_call.1']
    #allocation7 [shape = 'u8[8192]{0}', space=vmem, size = 0x2000, scoped, tag = 'output window, operand 0, single buffered']
    %8 = vsyncpa [#allocation3], 0
    %9 = vsyncpa [#allocation6], 0
    %10 = vsyncpa [#allocation4], 0
    // Predicated region
    $region2: #{tpu_custom_call.1} parent=1 // pred_check
      _
    $region3: #{tpu_custom_call.1} parent=1 // pred_check_branch
      %12 = sbr.rel (0) target = $region5
    $region4: #{tpu_custom_call.1} parent=1 // pred_region
      %s14 = ssub.s32 256, 256
      %15 = vsyncadd [#allocation3], %s14
      %s16 = sshll.u32 [#allocation2], 4
      %s17 = int_to_ptr.vmem [resolvable:$true] %s16
      %22 = dma.hbm_to_vmem [thread:$0]  %s0, 256, %s17, [#allocation3], 128, 128, 8
    $region5: #{tpu_custom_call.1} parent=1 // pred_fallthru
      _
    // Predicated region
    $region6: #{tpu_custom_call.1} parent=1 // pred_check
      _
    $region7: #{tpu_custom_call.1} parent=1 // pred_check_branch
      %24 = sbr.rel (0) target = $region9
    $region8: #{tpu_custom_call.1} parent=1 // pred_region
      %s26 = ssub.s32 2048, 2048
      %27 = vsyncadd [#allocation6], %s26
      %s28 = sshll.u32 [#allocation5], 4
      %s29 = int_to_ptr.vmem [resolvable:$true] %s28
      %34 = dma.hbm_to_vmem [thread:$0]  %s1, 2048, %s29, [#allocation6], 128, 128, 8
    $region9: #{tpu_custom_call.1} parent=1 // pred_fallthru
      _
    // Predicated region
    $region10: #{tpu_custom_call.1} parent=1 // pred_check
      _
    $region11: #{tpu_custom_call.1} parent=1 // pred_check_branch
      %36 = sbr.rel (0) target = $region13
    $region12: #{tpu_custom_call.1} parent=1 // pred_region
      _
    $region13: #{tpu_custom_call.1} parent=1 // pred_fallthru
      _
    // Predicated region
    $region14: #{tpu_custom_call.1} parent=1 // pred_check
      _
    $region15: #{tpu_custom_call.1} parent=1 // pred_check_branch
      %38 = sbr.rel (0) target = $region17
    $region16: #{tpu_custom_call.1} parent=1 // pred_region
      %39 = dma.done [#allocation3], 256
    $region17: #{tpu_custom_call.1} parent=1 // pred_fallthru
      _
    // Predicated region
    $region18: #{tpu_custom_call.1} parent=1 // pred_check
      _
    $region19: #{tpu_custom_call.1} parent=1 // pred_check_branch
      %41 = sbr.rel (0) target = $region21
    $region20: #{tpu_custom_call.1} parent=1 // pred_region
      %42 = dma.done [#allocation6], 2048
    $region21: #{tpu_custom_call.1} parent=1 // pred_fallthru
      _
    %v43 = vld [vmem:[#allocation2] sm:$0xff]
    %v44 = vld [vmem:[#allocation2 + $0x8] sm:$0xff]
    %v45 = vld [vmem:[#allocation5] sm:$0xff]
    %v46 = vld [vmem:[#allocation5 + $0x8] sm:$0xff]
    %v47 = vld [vmem:[#allocation5 + $0x10] sm:$0xff]
    %v48 = vld [vmem:[#allocation5 + $0x18] sm:$0xff]
    %v49 = vld [vmem:[#allocation5 + $0x20] sm:$0xff]
    %v50 = vld [vmem:[#allocation5 + $0x28] sm:$0xff]
    %v51 = vld [vmem:[#allocation5 + $0x30] sm:$0xff]
    %v52 = vld [vmem:[#allocation5 + $0x38] sm:$0xff]
    %v53 = vld [vmem:[#allocation5 + $0x40] sm:$0xff]
    %v54 = vld [vmem:[#allocation5 + $0x48] sm:$0xff]
    %v55 = vld [vmem:[#allocation5 + $0x50] sm:$0xff]
    %v56 = vld [vmem:[#allocation5 + $0x58] sm:$0xff]
    %v57 = vld [vmem:[#allocation5 + $0x60] sm:$0xff]
    %v58 = vld [vmem:[#allocation5 + $0x68] sm:$0xff]
    %v59 = vld [vmem:[#allocation5 + $0x70] sm:$0xff]
    %v60 = vld [vmem:[#allocation5 + $0x78] sm:$0xff]
    %v61 = vld [vmem:[%s2] sm:$0x1]
    %v63 = vlaneseq
    %v64 = vshrl.u32 %v63, 7
    %v65 = vsub.s32 0, %v64
    %v66 = vrot.slane %v61, %v65
    %68 = vmatprep.subr.mxu0 0.0
    %69 = vmatpush1.msra.mxu0 %v45
    %70 = vmatprep.subr.mxu0 0.0
    %71 = vmatpush1.msra.mxu0 %v46
    %72 = vmatprep.subr.mxu0 0.0
    %73 = vmatpush1.msra.mxu0 %v47
    %74 = vmatprep.subr.mxu0 0.0
    %75 = vmatpush1.msra.mxu0 %v48
    %76 = vmatprep.subr.mxu0 0.0
    %77 = vmatpush1.msra.mxu0 %v49
    %78 = vmatprep.subr.mxu0 0.0
    %79 = vmatpush1.msra.mxu0 %v50
    %80 = vmatprep.subr.mxu0 0.0
    %81 = vmatpush1.msra.mxu0 %v51
    %82 = vmatprep.subr.mxu0 0.0
    %83 = vmatpush1.msra.mxu0 %v52
    %84 = vmatprep.subr.mxu0 0.0
    %85 = vmatpush1.msra.mxu0 %v53
    %86 = vmatprep.subr.mxu0 0.0
    %87 = vmatpush1.msra.mxu0 %v54
    %88 = vmatprep.subr.mxu0 0.0
    %89 = vmatpush1.msra.mxu0 %v55
    %90 = vmatprep.subr.mxu0 0.0
    %91 = vmatpush1.msra.mxu0 %v56
    %92 = vmatprep.subr.mxu0 0.0
    %93 = vmatpush1.msra.mxu0 %v57
    %94 = vmatprep.subr.mxu0 0.0
    %95 = vmatpush1.msra.mxu0 %v58
    %96 = vmatprep.subr.mxu0 0.0
    %97 = vmatpush1.msra.mxu0 %v59
    %98 = vmatprep.subr.mxu0 0.0
    %99 = vmatpush1.msra.mxu0 %v60
    %100 = vmatprep.subr.mxu0 0.0
    %101 = vmatpush1.msra.mxu0 0.0
    %102 = vmatprep.subr.mxu0 0.0
    %103 = vmatpush1.msra.mxu0 0.0
    %104 = vmatprep.subr.mxu0 0.0
    %105 = vmatpush1.msra.mxu0 0.0
    %106 = vmatprep.subr.mxu0 0.0
    %107 = vmatpush1.msra.mxu0 0.0
    %108 = vmatprep.subr.mxu0 0.0
    %109 = vmatpush1.msra.mxu0 0.0
    %110 = vmatprep.subr.mxu0 0.0
    %111 = vmatpush1.msra.mxu0 0.0
    %112 = vmatprep.subr.mxu0 0.0
    %113 = vmatpush1.msra.mxu0 0.0
    %114 = vmatprep.subr.mxu0 0.0
    %115 = vmatpush1.msra.mxu0 0.0
    %116 = vmatprep.subr.mxu0 0.0
    %117 = vmatpush1.msra.mxu0 0.0
    %118 = vmatprep.subr.mxu0 0.0
    %119 = vmatpush1.msra.mxu0 0.0
    %120 = vmatprep.subr.mxu0 0.0
    %121 = vmatpush1.msra.mxu0 0.0
    %122 = vmatprep.subr.mxu0 0.0
    %123 = vmatpush1.msra.mxu0 0.0
    %124 = vmatprep.subr.mxu0 0.0
    %125 = vmatpush1.msra.mxu0 0.0
    %126 = vmatprep.subr.mxu0 0.0
    %127 = vmatpush1.msra.mxu0 0.0
    %128 = vmatprep.subr.mxu0 0.0
    %129 = vmatpush1.msra.mxu0 0.0
    %130 = vmatprep.subr.mxu0 0.0
    %131 = vmatpush1.msra.mxu0 0.0
    %132 = vmatprep.mubr.f32.mxu0 0.0
    %133 = vmatmul.mubr.f32.gmra.mrb[0].mxu0 %v43
    %v134 = vpop.f32.mrb[0].mxu0
    %v135 = vadd.f32 %v66, %v134
    %v136 = vpop.f32.mrb[0].mxu0
    %137 = vmatprep.mubr.f32.mxu0 0.0
    %138 = vmatmul.mubr.f32.gmra.mrb[0].mxu0 %v44
    %v139 = vpop.f32.mrb[0].mxu0
    %v140 = vadd.f32 %v66, %v139
    %v141 = vpop.f32.mrb[0].mxu0
    %142 = vdwg.mxu0
    %v143 = vadd.f32 %v135, %v43
    %v144 = vadd.f32 %v140, %v44
    %145 = vst [vmem:[#allocation7] sm:$0xff] %v143
    %146 = vst [vmem:[#allocation7 + $0x8] sm:$0xff] %v144
    // Predicated region
    $region22: #{tpu_custom_call.1} parent=1 // pred_check
      _
    $region23: #{tpu_custom_call.1} parent=1 // pred_check_branch
      %148 = sbr.rel (0) target = $region25
    $region24: #{tpu_custom_call.1} parent=1 // pred_region
      %s150 = ssub.s32 256, 256
      %151 = vsyncadd [#allocation4], %s150
      %s152 = sshll.u32 [#allocation7], 4
      %s153 = int_to_ptr.vmem [resolvable:$true] %s152
      %158 = dma.vmem_to_hbm [thread:$0]  %s153, 256, %s3, [#allocation4], 128, 128, 8
    $region25: #{tpu_custom_call.1} parent=1 // pred_fallthru
      _
    // Predicated region
    $region26: #{tpu_custom_call.1} parent=1 // pred_check
      _
    $region27: #{tpu_custom_call.1} parent=1 // pred_check_branch
      %160 = sbr.rel (0) target = $region29
    $region28: #{tpu_custom_call.1} parent=1 // pred_region
      %161 = dma.done [#allocation4], 256
    $region29: #{tpu_custom_call.1} parent=1 // pred_fallthru
      _
    %162 = vsyncpa [#allocation3], 1
    %163 = vsyncpa [#allocation6], 1
    %164 = vsyncpa [#allocation4], 1

</llo_original>
